<compile_context>
chip_gen: v5e
topology: v5e:2x2
jax: 0.10.0
libtpu: 0.0.40
codegen_flags: <defaults>
</compile_context>

<pallas_src>
import jax
import jax.numpy as jnp
from jax.experimental import pallas as pl
from jax.experimental.pallas import tpu as pltpu

# activation_func('relu') in the source codebase behaves as LeakyReLU(negative_slope=0.001)
_NEG_SLOPE = 0.001


def _round_up(v, m):
    return ((v + m - 1) // m) * m


def _vmem_capacity_bytes():
    try:
        return int(pltpu.get_tpu_info().vmem_capacity_bytes)
    except Exception:
        return 64 << 20  # conservative fallback (v7x per-TC size)


def _make_mlp_kernel(n_layers):
    """Fused kernel: h = x; for each layer: h = leaky_relu(h @ W_i + b_i); out = h."""
    def kernel(*refs):
        x_ref = refs[0]
        o_ref = refs[-1]
        h = x_ref[...]
        for li in range(n_layers):
            w_ref = refs[1 + 2 * li]          # (Kp_i, Np_i) resident in VMEM
            b_ref = refs[2 + 2 * li]          # (1, Np_i)    resident in VMEM
            y = jax.lax.dot_general(
                h, w_ref[...],
                dimension_numbers=(((1,), (0,)), ((), ())),
                preferred_element_type=jnp.float32,
            )
            y = y + b_ref[...]                               # broadcast over rows
            h = jnp.where(y > 0, y, _NEG_SLOPE * y)          # LeakyReLU after EVERY layer
        o_ref[...] = h.astype(o_ref.dtype)
    return kernel


def init_query_embedding_params(key, n_layer, in_dim, embedding_dim):
    """Mirrors QueryEmbedding.__init__: (n_layer-1) hidden Linear(last, in_dim//2)
    with bias filled to 0.0, then a final Linear(last, embedding_dim).
    Returns torch-layout params: list of (W (N, K), b (N,))."""
    hid_dim = in_dim // 2
    layer_dims = []
    last = in_dim
    for _ in range(n_layer - 1):
        layer_dims.append((last, hid_dim))
        last = hid_dim
    layer_dims.append((last, embedding_dim))

    params = []
    for i, (fan_in, fan_out) in enumerate(layer_dims):
        key, kw, kb = jax.random.split(key, 3)
        bound = 1.0 / (fan_in ** 0.5)
        w = jax.random.uniform(kw, (fan_out, fan_in), minval=-bound, maxval=bound,
                               dtype=jnp.float32)
        if i < len(layer_dims) - 1:
            b = jnp.zeros((fan_out,), jnp.float32)   # linear_model.bias.data.fill_(0.0)
        else:
            b = jax.random.uniform(kb, (fan_out,), minval=-bound, maxval=bound,
                                   dtype=jnp.float32)
        params.append((w, b))
    return params


def prepare_query_embedding_params(params):
    """One-time host prep (amortized to zero across forward calls):
    transpose torch-layout (N, K) weights to (Kp, Np) with N padded to a lane-dense
    multiple of 128 and K padded to the previous layer's padded width.  Zero padding
    keeps the math exact: padded activation columns are leaky_relu(0) = 0 and padded
    weight rows are 0."""
    prepared = []
    prev_np = None
    for w, b in params:
        n, k = w.shape
        kp = k if prev_np is None else prev_np
        np_ = _round_up(n, 128)
        wt = jnp.zeros((kp, np_), jnp.float32).at[:k, :n].set(w.T.astype(jnp.float32))
        bp = jnp.zeros((1, np_), jnp.float32).at[0, :n].set(b.astype(jnp.float32))
        prepared.append((wt, bp))
        prev_np = np_
    return {"layers": prepared, "out_dim": params[-1][0].shape[0]}


def query_embedding_forward(x, prepared):
    """Forward pass of QueryEmbedding as a single fused Pallas kernel."""
    layers = prepared["layers"]
    out_dim = prepared["out_dim"]
    n_layers = len(layers)

    M, K = x.shape
    assert layers[0][0].shape[0] == K, "in_features mismatch"
    np_last = layers[-1][0].shape[1]

    # Pad rows once (sublane alignment) for the whole chain.
    Mp = _round_up(M, 8)
    xp = x if Mp == M else jnp.pad(x, ((0, Mp - M), (0, 0)))

    # ---- VMEM-aware row-tile selection (params resident, x/out streamed) ----
    cap = _vmem_capacity_bytes()
    budget = int(cap * 0.70)
    param_bytes = 4 * sum(w.shape[0] * w.shape[1] + b.shape[1] for w, b in layers)
    max_w = max([K] + [w.shape[1] for w, _ in layers])

    tm = min(1024, Mp)
    if Mp > 8:
        # expose >= 2 row tiles so both v7x TensorCores get work (near-free on 1-TC parts)
        tm = min(tm, _round_up((Mp + 1) // 2, 8))
    tm = _round_up(tm, 8)

    def vmem_need(tm_):
        stream = 2 * 4 * (tm_ * K + tm_ * np_last)   # double-buffered x / out tiles
        temps = 2 * 4 * tm_ * max_w                  # intermediate activations
        return param_bytes + stream + temps

    while vmem_need(tm) > budget and tm > 8:
        tm = max(8, _round_up(tm // 2, 8))

    grid = (pl.cdiv(Mp, tm),)   # Pallas masks the ragged last row tile

    in_specs = [pl.BlockSpec((tm, K), lambda i: (i, 0))]        # streamed x row tile
    args = [xp]
    for w, b in layers:
        kp, np_ = w.shape
        in_specs.append(pl.BlockSpec((kp, np_), lambda i: (0, 0)))  # resident weight
        in_specs.append(pl.BlockSpec((1, np_), lambda i: (0, 0)))   # resident bias
        args.extend((w, b))

    flops = 0
    prev = K
    for w, _ in layers:
        flops += 2 * Mp * prev * w.shape[1]
        prev = w.shape[1]
    bytes_accessed = 4 * (Mp * K + Mp * np_last) + param_bytes

    out = pl.pallas_call(
        _make_mlp_kernel(n_layers),
        out_shape=jax.ShapeDtypeStruct((Mp, np_last), x.dtype),
        grid_spec=pltpu.PrefetchScalarGridSpec(
            num_scalar_prefetch=0,
            grid=grid,
            in_specs=in_specs,
            out_specs=pl.BlockSpec((tm, np_last), lambda i: (i, 0)),
        ),
        compiler_params=pltpu.CompilerParams(
            dimension_semantics=("parallel",),
            vmem_limit_bytes=int(min(cap, max(vmem_need(tm) + (12 << 20), 32 << 20))),
        ),
        cost_estimate=pl.CostEstimate(
            flops=flops, transcendentals=0, bytes_accessed=bytes_accessed),
    )(*args)

    if Mp != M or np_last != out_dim:
        out = out[:M, :out_dim]
    return out


if __name__ == "__main__":
    # Small deterministic example consistent with the module:
    #   n_layer=2 -> one hidden layer (in_dim -> in_dim//2) + final (-> embedding_dim)
    n_layer = 2
    in_dim = 32
    embedding_dim = 64
    batch = 8

    key = jax.random.PRNGKey(0)
    key, kx = jax.random.split(key)
    x = jax.random.normal(kx, (batch, in_dim), dtype=jnp.float32)
    params = init_query_embedding_params(key, n_layer, in_dim, embedding_dim)
    prepared = prepare_query_embedding_params(params)   # one-time host prep

    out = query_embedding_forward(x, prepared)
    out = jax.block_until_ready(out)

    # Pure-JAX reference (same math as the PyTorch forward, torch-layout params)
    ref = x
    for w, b in params:
        ref = ref @ w.T + b
        ref = jnp.where(ref > 0, ref, _NEG_SLOPE * ref)

    assert out.shape == (batch, embedding_dim)
    assert jnp.allclose(out, ref, atol=1e-5, rtol=1e-5), float(jnp.max(jnp.abs(out - ref)))

    print("KERNEL_OK")
</pallas_src>

<mosaic_0001>
module attributes {stable_mosaic.version = 11 : i64} {
  func.func @kernel(%arg0: i32, %arg1: memref<8x32xf32, #tpu.memory_space<vmem>>, %arg2: memref<32x128xf32, #tpu.memory_space<vmem>>, %arg3: memref<1x128xf32, #tpu.memory_space<vmem>>, %arg4: memref<128x128xf32, #tpu.memory_space<vmem>>, %arg5: memref<1x128xf32, #tpu.memory_space<vmem>>, %arg6: memref<8x128xf32, #tpu.memory_space<vmem>>) attributes {dimension_semantics = [#tpu.dimension_semantics<parallel>], iteration_bounds = array<i64: 1>, scalar_prefetch = 0 : i64, scratch_operands = 0 : i64, tpu.core_type = #tpu.core_type<tc>, window_params = [{transform_indices = @transform_0, window_bounds = array<i64: 8, 32>}, {pipeline_mode = #tpu.pipeline_mode<synchronous>, transform_indices = @transform_1, window_bounds = array<i64: 32, 128>}, {pipeline_mode = #tpu.pipeline_mode<synchronous>, transform_indices = @transform_2, window_bounds = array<i64: 1, 128>}, {pipeline_mode = #tpu.pipeline_mode<synchronous>, transform_indices = @transform_3, window_bounds = array<i64: 128, 128>}, {pipeline_mode = #tpu.pipeline_mode<synchronous>, transform_indices = @transform_4, window_bounds = array<i64: 1, 128>}, {transform_indices = @transform_5, window_bounds = array<i64: 8, 128>}]} {
    %c0 = arith.constant 0 : index
    %c0_0 = arith.constant 0 : index
    %0 = vector.load %arg1[%c0, %c0_0] : memref<8x32xf32, #tpu.memory_space<vmem>>, vector<8x32xf32>
    %c0_1 = arith.constant 0 : index
    %c0_2 = arith.constant 0 : index
    %1 = vector.load %arg2[%c0_1, %c0_2] : memref<32x128xf32, #tpu.memory_space<vmem>>, vector<32x128xf32>
    %cst = arith.constant dense<0.000000e+00> : vector<8x128xf32>
    %2 = tpu.matmul %0, %1, %cst {dimension_numbers = #tpu.dot_dimension_numbers<[1], [0], [0], [1], [0, 0, 1, 1], [], []>} : vector<8x32xf32>, vector<32x128xf32>, vector<8x128xf32> -> vector<8x128xf32>
    %c0_3 = arith.constant 0 : index
    %c0_4 = arith.constant 0 : index
    %3 = vector.load %arg3[%c0_3, %c0_4] : memref<1x128xf32, #tpu.memory_space<vmem>>, vector<1x128xf32>
    %4 = vector.broadcast %3 : vector<1x128xf32> to vector<8x128xf32>
    %5 = arith.addf %2, %4 : vector<8x128xf32>
    %cst_5 = arith.constant 0.000000e+00 : f32
    %6 = vector.broadcast %cst_5 : f32 to vector<8x128xf32>
    %7 = arith.cmpf ogt, %5, %6 : vector<8x128xf32>
    %cst_6 = arith.constant 1.000000e-03 : f32
    %8 = vector.broadcast %cst_6 : f32 to vector<8x128xf32>
    %9 = arith.mulf %8, %5 : vector<8x128xf32>
    %10 = arith.select %7, %5, %9 : vector<8x128xi1>, vector<8x128xf32>
    %c0_7 = arith.constant 0 : index
    %c0_8 = arith.constant 0 : index
    %11 = vector.load %arg4[%c0_7, %c0_8] : memref<128x128xf32, #tpu.memory_space<vmem>>, vector<128x128xf32>
    %cst_9 = arith.constant dense<0.000000e+00> : vector<8x128xf32>
    %12 = tpu.matmul %10, %11, %cst_9 {dimension_numbers = #tpu.dot_dimension_numbers<[1], [0], [0], [1], [0, 0, 1, 1], [], []>} : vector<8x128xf32>, vector<128x128xf32>, vector<8x128xf32> -> vector<8x128xf32>
    %c0_10 = arith.constant 0 : index
    %c0_11 = arith.constant 0 : index
    %13 = vector.load %arg5[%c0_10, %c0_11] : memref<1x128xf32, #tpu.memory_space<vmem>>, vector<1x128xf32>
    %14 = vector.broadcast %13 : vector<1x128xf32> to vector<8x128xf32>
    %15 = arith.addf %12, %14 : vector<8x128xf32>
    %cst_12 = arith.constant 0.000000e+00 : f32
    %16 = vector.broadcast %cst_12 : f32 to vector<8x128xf32>
    %17 = arith.cmpf ogt, %15, %16 : vector<8x128xf32>
    %cst_13 = arith.constant 1.000000e-03 : f32
    %18 = vector.broadcast %cst_13 : f32 to vector<8x128xf32>
    %19 = arith.mulf %18, %15 : vector<8x128xf32>
    %20 = arith.select %17, %15, %19 : vector<8x128xi1>, vector<8x128xf32>
    %c0_14 = arith.constant 0 : index
    %c0_15 = arith.constant 0 : index
    %21 = vector.load %arg6[%c0_14, %c0_15] : memref<8x128xf32, #tpu.memory_space<vmem>>, vector<8x128xf32>
    tpu.vector_store %arg6[%c0_14, %c0_15], %20 {strides = array<i32>} : memref<8x128xf32, #tpu.memory_space<vmem>>, vector<8x128xf32>,
    return
  }
  func.func @transform_0(%arg0: i32) -> (i32, i32) {
    %c0_i32 = arith.constant 0 : i32
    %c0_i32_0 = arith.constant 0 : i32
    return %arg0, %c0_i32 : i32, i32
  }
  func.func @transform_1(%arg0: i32) -> (i32, i32) {
    %c0_i32 = arith.constant 0 : i32
    %c0_i32_0 = arith.constant 0 : i32
    %c0_i32_1 = arith.constant 0 : i32
    return %c0_i32, %c0_i32_0 : i32, i32
  }
  func.func @transform_2(%arg0: i32) -> (i32, i32) {
    %c0_i32 = arith.constant 0 : i32
    %c0_i32_0 = arith.constant 0 : i32
    %c0_i32_1 = arith.constant 0 : i32
    return %c0_i32, %c0_i32_0 : i32, i32
  }
  func.func @transform_3(%arg0: i32) -> (i32, i32) {
    %c0_i32 = arith.constant 0 : i32
    %c0_i32_0 = arith.constant 0 : i32
    %c0_i32_1 = arith.constant 0 : i32
    return %c0_i32, %c0_i32_0 : i32, i32
  }
  func.func @transform_4(%arg0: i32) -> (i32, i32) {
    %c0_i32 = arith.constant 0 : i32
    %c0_i32_0 = arith.constant 0 : i32
    %c0_i32_1 = arith.constant 0 : i32
    return %c0_i32, %c0_i32_0 : i32, i32
  }
  func.func @transform_5(%arg0: i32) -> (i32, i32) {
    %c0_i32 = arith.constant 0 : i32
    %c0_i32_0 = arith.constant 0 : i32
    return %arg0, %c0_i32 : i32, i32
  }
}

</mosaic_0001>

<llo_original>
// kernel: tpu_custom_call.1
$region0: #{tpu_custom_call.1}
  #allocation0 [shape = 'u32[]', space=smem, size = 0x4, offset = 0x4, fixed_abs, tag = 'smem constant byte address 0x4 - core index']
  #allocation1 [shape = 'u32[72,128]{1,0:T(1,128)}', space=vmem, size = 0x9000, scoped, tag = 'internal scratch']
  %s0 = inlined_call_operand.hbm [shape: f32[8,32], index: 0, kind: input, shape index: {}]
  %s1 = inlined_call_operand.hbm [shape: f32[32,128], index: 1, kind: input, shape index: {}]
  %s2 = inlined_call_operand.vmem [shape: f32[1,128], index: 2, kind: input, shape index: {}]
  %s3 = inlined_call_operand.hbm [shape: f32[128,128], index: 3, kind: input, shape index: {}]
  %s4 = inlined_call_operand.vmem [shape: f32[1,128], index: 4, kind: input, shape index: {}]
  %s5 = inlined_call_operand.hbm [shape: f32[8,128], index: 5, kind: output, shape index: {}]
  %s6 = sld [smem:[#allocation0]]
  $region42: #{tpu_custom_call.1} parent=0
    _
  %s8 = ssub.s32 1, %s6
  %s9 = scalar_select 0, %s8, %s6
  $region1: #{tpu_custom_call.1} parent=0
    #allocation2 [shape = 'u8[4096]{0}', space=vmem, size = 0x1000, scoped, tag = 'input window, operand 0, single buffered']
    #allocation3 [shape = 's32[1]{0}', space=sflag, size = 0x4, scoped, tag = 'scoped memory for tpu_custom_call.1']
    #allocation4 [shape = 's32[1]{0}', space=sflag, size = 0x4, scoped, tag = 'scoped memory for tpu_custom_call.1']
    #allocation5 [shape = 'u8[16384]{0}', space=vmem, size = 0x4000, scoped, tag = 'input window, operand 1, single buffered']
    #allocation6 [shape = 's32[1]{0}', space=sflag, size = 0x4, scoped, tag = 'scoped memory for tpu_custom_call.1']
    #allocation7 [shape = 'u8[65536]{0}', space=vmem, size = 0x10000, scoped, tag = 'input window, operand 3, single buffered']
    #allocation8 [shape = 'u8[4096]{0}', space=vmem, size = 0x1000, scoped, tag = 'output window, operand 0, single buffered']
    %10 = vsyncpa [#allocation3], 0
    %11 = vsyncpa [#allocation6], 0
    %12 = vsyncpa [#allocation4], 0
    // Predicated region
    $region2: #{tpu_custom_call.1} parent=1 // pred_check
      _
    $region3: #{tpu_custom_call.1} parent=1 // pred_check_branch
      %14 = sbr.rel (0) target = $region5
    $region4: #{tpu_custom_call.1} parent=1 // pred_region
      %16 = vsyncadd [#allocation3], 0
      %s18 = sshll.u32 %s0, 4
      %s19 = int_to_ptr.hbm [resolvable:$true] %s18
      %s20 = sshll.u32 [#allocation2], 4
      %s21 = int_to_ptr.vmem [resolvable:$true] %s20
      %23 = dma.hbm_to_vmem [thread:$0]  %s19, 128, %s21, [#allocation3]
    $region5: #{tpu_custom_call.1} parent=1 // pred_fallthru
      _
    // Predicated region
    $region6: #{tpu_custom_call.1} parent=1 // pred_check
      _
    $region7: #{tpu_custom_call.1} parent=1 // pred_check_branch
      %25 = sbr.rel (0) target = $region9
    $region8: #{tpu_custom_call.1} parent=1 // pred_region
      %27 = vsyncadd [#allocation6], 0
      %s28 = sshll.u32 %s1, 4
      %s29 = int_to_ptr.hbm [resolvable:$true] %s28
      %s30 = sshll.u32 [#allocation5], 4
      %s31 = int_to_ptr.vmem [resolvable:$true] %s30
      %36 = dma.hbm_to_vmem [thread:$0]  %s29, 512, %s31, [#allocation6], 128, 128, 8
    $region9: #{tpu_custom_call.1} parent=1 // pred_fallthru
      _
    // Predicated region
    $region10: #{tpu_custom_call.1} parent=1 // pred_check
      _
    $region11: #{tpu_custom_call.1} parent=1 // pred_check_branch
      %38 = sbr.rel (0) target = $region13
    $region12: #{tpu_custom_call.1} parent=1 // pred_region
      _
    $region13: #{tpu_custom_call.1} parent=1 // pred_fallthru
      _
    // Predicated region
    $region14: #{tpu_custom_call.1} parent=1 // pred_check
      _
    $region15: #{tpu_custom_call.1} parent=1 // pred_check_branch
      %40 = sbr.rel (0) target = $region17
    $region16: #{tpu_custom_call.1} parent=1 // pred_region
      %42 = vsyncadd [#allocation6], 0
      %s43 = sshll.u32 %s3, 4
      %s44 = int_to_ptr.hbm [resolvable:$true] %s43
      %s45 = sshll.u32 [#allocation7], 4
      %s46 = int_to_ptr.vmem [resolvable:$true] %s45
      %51 = dma.hbm_to_vmem [thread:$0]  %s44, 2048, %s46, [#allocation6], 128, 128, 8
    $region17: #{tpu_custom_call.1} parent=1 // pred_fallthru
      _
    // Predicated region
    $region18: #{tpu_custom_call.1} parent=1 // pred_check
      _
    $region19: #{tpu_custom_call.1} parent=1 // pred_check_branch
      %53 = sbr.rel (0) target = $region21
    $region20: #{tpu_custom_call.1} parent=1 // pred_region
      _
    $region21: #{tpu_custom_call.1} parent=1 // pred_fallthru
      _
    // Predicated region
    $region22: #{tpu_custom_call.1} parent=1 // pred_check
      _
    $region23: #{tpu_custom_call.1} parent=1 // pred_check_branch
      %55 = sbr.rel (0) target = $region25
    $region24: #{tpu_custom_call.1} parent=1 // pred_region
      %57 = dma.done [#allocation3], 128
    $region25: #{tpu_custom_call.1} parent=1 // pred_fallthru
      _
    // Predicated region
    $region26: #{tpu_custom_call.1} parent=1 // pred_check
      _
    $region27: #{tpu_custom_call.1} parent=1 // pred_check_branch
      %59 = sbr.rel (0) target = $region29
    $region28: #{tpu_custom_call.1} parent=1 // pred_region
      %61 = dma.done [#allocation6], 512
    $region29: #{tpu_custom_call.1} parent=1 // pred_fallthru
      _
    // Predicated region
    $region30: #{tpu_custom_call.1} parent=1 // pred_check
      _
    $region31: #{tpu_custom_call.1} parent=1 // pred_check_branch
      %63 = sbr.rel (0) target = $region33
    $region32: #{tpu_custom_call.1} parent=1 // pred_region
      %65 = dma.done [#allocation6], 2048
    $region33: #{tpu_custom_call.1} parent=1 // pred_fallthru
      _
    %v66 = vld [vmem:[#allocation2] sm:$0xff]
    %v67 = vld [vmem:[#allocation5] sm:$0xff]
    %v68 = vld [vmem:[#allocation5 + $0x8] sm:$0xff]
    %v69 = vld [vmem:[#allocation5 + $0x10] sm:$0xff]
    %v70 = vld [vmem:[#allocation5 + $0x18] sm:$0xff]
    %v71 = vld [vmem:[%s2] sm:$0x1]
    %v73 = vperm.slane %v71, 0
    %vm75 = vcmask 261120
    %v77 = vsel %vm75, %v66, 0
    %79 = vmatpush.msra.mxu0 0.0
    %80 = vmatpush.msra.mxu0 0.0
    %81 = vmatpush.msra.mxu0 0.0
    %82 = vmatpush.msra.mxu0 0.0
    %83 = vmatpush.msra.mxu0 0.0
    %84 = vmatpush.msra.mxu0 0.0
    %85 = vmatpush.msra.mxu0 0.0
    %86 = vmatpush.msra.mxu0 0.0
    %87 = vmatpush.msra.mxu0 0.0
    %88 = vmatpush.msra.mxu0 0.0
    %89 = vmatpush.msra.mxu0 0.0
    %90 = vmatpush.msra.mxu0 0.0
    %91 = vmatpush.msra.mxu0 %v70
    %92 = vmatpush.msra.mxu0 %v69
    %93 = vmatpush.msra.mxu0 %v68
    %94 = vmatpush.msra.mxu0 %v67
    %95 = vmatmul.f32.gmra.mxu0 %v77
    %v96 = vpop.f32.mrf.mxu0
    %v97 = vadd.f32 %v73, %v96
    %98 = vdwg.mxu0
    %vm99 = vcmp.gt.f32.partialorder %v97, 0.0
    %v100 = vmul.f32 %v97, 0.001
    %v101 = vsel %vm99, %v97, %v100
    %v102 = vld [vmem:[#allocation7] sm:$0xff]
    %v103 = vld [vmem:[#allocation7 + $0x8] sm:$0xff]
    %v104 = vld [vmem:[#allocation7 + $0x10] sm:$0xff]
    %v105 = vld [vmem:[#allocation7 + $0x18] sm:$0xff]
    %v106 = vld [vmem:[#allocation7 + $0x20] sm:$0xff]
    %v107 = vld [vmem:[#allocation7 + $0x28] sm:$0xff]
    %v108 = vld [vmem:[#allocation7 + $0x30] sm:$0xff]
    %v109 = vld [vmem:[#allocation7 + $0x38] sm:$0xff]
    %v110 = vld [vmem:[#allocation7 + $0x40] sm:$0xff]
    %v111 = vld [vmem:[#allocation7 + $0x48] sm:$0xff]
    %v112 = vld [vmem:[#allocation7 + $0x50] sm:$0xff]
    %v113 = vld [vmem:[#allocation7 + $0x58] sm:$0xff]
    %v114 = vld [vmem:[#allocation7 + $0x60] sm:$0xff]
    %v115 = vld [vmem:[#allocation7 + $0x68] sm:$0xff]
    %v116 = vld [vmem:[#allocation7 + $0x70] sm:$0xff]
    %v117 = vld [vmem:[#allocation7 + $0x78] sm:$0xff]
    %v118 = vld [vmem:[%s4] sm:$0x1]
    %v120 = vperm.slane %v118, 0
    %122 = vmatpush.msra.mxu0 %v117
    %123 = vmatpush.msra.mxu0 %v116
    %124 = vmatpush.msra.mxu0 %v115
    %125 = vmatpush.msra.mxu0 %v114
    %126 = vmatpush.msra.mxu0 %v113
    %127 = vmatpush.msra.mxu0 %v112
    %128 = vmatpush.msra.mxu0 %v111
    %129 = vmatpush.msra.mxu0 %v110
    %130 = vmatpush.msra.mxu0 %v109
    %131 = vmatpush.msra.mxu0 %v108
    %132 = vmatpush.msra.mxu0 %v107
    %133 = vmatpush.msra.mxu0 %v106
    %134 = vmatpush.msra.mxu0 %v105
    %135 = vmatpush.msra.mxu0 %v104
    %136 = vmatpush.msra.mxu0 %v103
    %137 = vmatpush.msra.mxu0 %v102
    %138 = vmatmul.f32.gmra.mxu0 %v101
    %v139 = vpop.f32.mrf.mxu0
    %v140 = vadd.f32 %v120, %v139
    %141 = vdwg.mxu0
    %vm142 = vcmp.gt.f32.partialorder %v140, 0.0
    %v143 = vmul.f32 %v140, 0.001
    %v144 = vsel %vm142, %v140, %v143
    %145 = vst [vmem:[#allocation8] sm:$0xff] %v144
    // Predicated region
    $region34: #{tpu_custom_call.1} parent=1 // pred_check
      _
    $region35: #{tpu_custom_call.1} parent=1 // pred_check_branch
      %147 = sbr.rel (0) target = $region37
    $region36: #{tpu_custom_call.1} parent=1 // pred_region
      %149 = vsyncadd [#allocation4], 0
      %s151 = sshll.u32 [#allocation8], 4
      %s152 = int_to_ptr.vmem [resolvable:$true] %s151
      %s153 = sshll.u32 %s5, 4
      %s154 = int_to_ptr.hbm [resolvable:$true] %s153
      %156 = dma.vmem_to_hbm [thread:$0]  %s152, 128, %s154, [#allocation4]
    $region37: #{tpu_custom_call.1} parent=1 // pred_fallthru
      _
    // Predicated region
    $region38: #{tpu_custom_call.1} parent=1 // pred_check
      _
    $region39: #{tpu_custom_call.1} parent=1 // pred_check_branch
      %158 = sbr.rel (0) target = $region41
    $region40: #{tpu_custom_call.1} parent=1 // pred_region
      %160 = dma.done [#allocation4], 128
    $region41: #{tpu_custom_call.1} parent=1 // pred_fallthru
      _
    %161 = vsyncpa [#allocation3], 1
    %162 = vsyncpa [#allocation6], 1
    %163 = vsyncpa [#allocation4], 1

</llo_original>
